<compile_context>
chip_gen: v5e
topology: v5e:2x2
jax: 0.10.0
libtpu: 0.0.40
codegen_flags: <defaults>
</compile_context>

<pallas_src>
import functools

import jax
import jax.numpy as jnp
from jax.experimental import pallas as pl
from jax.experimental.pallas import tpu as pltpu

EPS = 1e-5


# --------------- Phase 1: Linear1 + full-batch statistics accumulation --------------
def linear1_stats_kernel(x_ref, w1_ref, b1_ref, h_ref, stats_ref):
    # stats_ref: (2, hsz) f32 accumulator resident across the batch grid axis.
    #   row 0 = sum(h) over the full batch, row 1 = sum(h*h).
    @pl.when(pl.program_id(0) == 0)
    def _init():
        stats_ref[...] = jnp.zeros_like(stats_ref)

    # bf16 MXU operands, f32 accumulation.
    x = x_ref[...].astype(jnp.bfloat16)
    w1 = w1_ref[...].astype(jnp.bfloat16)
    h = jnp.dot(x, w1, preferred_element_type=jnp.float32) + b1_ref[...]
    h_ref[...] = h

    # Per-tile sublane (axis=0) reductions hit the XLU, hidden under the matmul.
    stats_ref[0:1, :] += jnp.sum(h, axis=0, keepdims=True)
    stats_ref[1:2, :] += jnp.sum(h * h, axis=0, keepdims=True)


# --------------- Phase 2: BatchNorm (batch stats) + ReLU + Linear2 -------------------
def bn_relu_linear2_kernel(h_ref, stats_ref, g_ref, beta_ref, w2_ref, b2_ref, o_ref,
                           *, inv_n):
    h = h_ref[...]                                   # (tm, hsz) f32
    mean = stats_ref[0:1, :] * inv_n                 # (1, hsz)
    var = stats_ref[1:2, :] * inv_n - mean * mean    # biased batch variance
    inv_std = jax.lax.rsqrt(var + EPS)
    scale = g_ref[...] * inv_std
    shift = beta_ref[...] - mean * scale
    hn = jnp.maximum(h * scale + shift, 0.0)         # BN affine + ReLU in f32

    w2 = w2_ref[...].astype(jnp.bfloat16)
    o_ref[...] = (
        jnp.dot(hn.astype(jnp.bfloat16), w2, preferred_element_type=jnp.float32)
        + b2_ref[...]
    )


def _pick_batch_tile(B, cap=256):
    """Largest divisor of B that is <= cap, preferring multiples of 8."""
    if B <= cap:
        return B
    fallback = None
    for t in range(cap, 0, -1):
        if B % t == 0:
            if t % 8 == 0:
                return t
            if fallback is None:
                fallback = t
    return fallback if fallback is not None else B


def prediction_forward(x, w1, b1, gamma, beta, w2, b2, *, tm=None):
    B, in_dim = x.shape
    hsz = w1.shape[1]
    out_dim = w2.shape[1]

    if tm is None:
        tm = _pick_batch_tile(B)
    assert B % tm == 0, f"batch {B} must be divisible by tile {tm}"
    n_tiles = B // tm

    itemsize = 4  # all VMEM blocks are f32
    # Double-buffered tile footprints + resident params + headroom.
    vmem1 = 2 * (tm * in_dim + tm * hsz + in_dim * hsz + 3 * hsz) * itemsize + (8 << 20)
    vmem2 = 2 * (tm * hsz + tm * out_dim + hsz * out_dim + 4 * hsz + out_dim) * itemsize \
        + (8 << 20)
    vmem1 = int(min(vmem1, 60 << 20))
    vmem2 = int(min(vmem2, 60 << 20))

    # ---- Phase 1: h = x @ W1 + b1, plus full-batch sum / sum-of-squares ----
    h, stats = pl.pallas_call(
        linear1_stats_kernel,
        out_shape=(
            jax.ShapeDtypeStruct((B, hsz), jnp.float32),
            jax.ShapeDtypeStruct((2, hsz), jnp.float32),
        ),
        grid=(n_tiles,),
        in_specs=[
            pl.BlockSpec((tm, in_dim), lambda i: (i, 0)),
            pl.BlockSpec((in_dim, hsz), lambda i: (0, 0)),   # resident weight
            pl.BlockSpec((1, hsz), lambda i: (0, 0)),        # resident bias
        ],
        out_specs=(
            pl.BlockSpec((tm, hsz), lambda i: (i, 0)),
            pl.BlockSpec((2, hsz), lambda i: (0, 0)),        # resident accumulator
        ),
        compiler_params=pltpu.CompilerParams(
            dimension_semantics=("arbitrary",),              # stats carried across tiles
            vmem_limit_bytes=vmem1,
        ),
    )(x, w1, b1)

    # ---- Phase 2: BatchNorm (full-batch stats) + ReLU + Linear2 ----
    kernel2 = functools.partial(bn_relu_linear2_kernel, inv_n=1.0 / B)
    out = pl.pallas_call(
        kernel2,
        out_shape=jax.ShapeDtypeStruct((B, out_dim), jnp.float32),
        grid=(n_tiles,),
        in_specs=[
            pl.BlockSpec((tm, hsz), lambda i: (i, 0)),
            pl.BlockSpec((2, hsz), lambda i: (0, 0)),
            pl.BlockSpec((1, hsz), lambda i: (0, 0)),
            pl.BlockSpec((1, hsz), lambda i: (0, 0)),
            pl.BlockSpec((hsz, out_dim), lambda i: (0, 0)),  # resident weight
            pl.BlockSpec((1, out_dim), lambda i: (0, 0)),
        ],
        out_specs=pl.BlockSpec((tm, out_dim), lambda i: (i, 0)),
        compiler_params=pltpu.CompilerParams(
            dimension_semantics=("parallel",),               # independent batch tiles
            vmem_limit_bytes=vmem2,
        ),
    )(h, stats, gamma, beta, w2, b2)
    return out


def reference_forward(x, w1, b1, gamma, beta, w2, b2, *, mxu_dtype=jnp.float32):
    h = jnp.dot(x.astype(mxu_dtype), w1.astype(mxu_dtype),
                preferred_element_type=jnp.float32) + b1
    mean = jnp.mean(h, axis=0, keepdims=True)
    var = jnp.mean(jnp.square(h - mean), axis=0, keepdims=True)
    h = (h - mean) * jax.lax.rsqrt(var + EPS)
    h = h * gamma + beta
    h = jnp.maximum(h, 0.0)
    return jnp.dot(h.astype(mxu_dtype), w2.astype(mxu_dtype),
                   preferred_element_type=jnp.float32) + b2


if __name__ == "__main__":
    # Small, lane-dense shapes (multiples of 128 on feature dims); tm=8 so the
    # multi-tile cross-batch statistics path is actually exercised (grid of 4).
    B, in_dim, hsz, out_dim = 32, 256, 128, 128
    tm = 8

    key = jax.random.PRNGKey(0)
    kx, kw1, kb1, kw2, kb2 = jax.random.split(key, 5)

    x = jax.random.normal(kx, (B, in_dim), dtype=jnp.float32)

    # Deterministic PyTorch-style uniform init.
    bound1 = 1.0 / (in_dim ** 0.5)
    w1 = jax.random.uniform(kw1, (in_dim, hsz), jnp.float32, -bound1, bound1)
    b1 = jax.random.uniform(kb1, (1, hsz), jnp.float32, -bound1, bound1)

    gamma = jnp.ones((1, hsz), jnp.float32)   # BatchNorm1d weight
    beta = jnp.zeros((1, hsz), jnp.float32)   # BatchNorm1d bias

    bound2 = 1.0 / (hsz ** 0.5)
    w2 = jax.random.uniform(kw2, (hsz, out_dim), jnp.float32, -bound2, bound2)
    b2 = jax.random.uniform(kb2, (1, out_dim), jnp.float32, -bound2, bound2)

    out = jax.block_until_ready(
        prediction_forward(x, w1, b1, gamma, beta, w2, b2, tm=tm))

    ref_matched = reference_forward(x, w1, b1, gamma, beta, w2, b2,
                                    mxu_dtype=jnp.bfloat16)   # same bf16 MXU math
    ref_f32 = reference_forward(x, w1, b1, gamma, beta, w2, b2,
                                mxu_dtype=jnp.float32)        # full-precision module

    assert out.shape == (B, out_dim)
    assert jnp.allclose(out, ref_matched, atol=1e-3, rtol=1e-3)
    assert jnp.allclose(out, ref_f32, atol=5e-2, rtol=5e-2)

    print("KERNEL_OK")
</pallas_src>

<mosaic_0001>
module attributes {stable_mosaic.version = 11 : i64} {
  func.func @linear1_stats_kernel(%arg0: i32, %arg1: memref<8x256xf32, #tpu.memory_space<vmem>>, %arg2: memref<256x128xf32, #tpu.memory_space<vmem>>, %arg3: memref<1x128xf32, #tpu.memory_space<vmem>>, %arg4: memref<8x128xf32, #tpu.memory_space<vmem>>, %arg5: memref<2x128xf32, #tpu.memory_space<vmem>>) attributes {dimension_semantics = [#tpu.dimension_semantics<arbitrary>], iteration_bounds = array<i64: 4>, scalar_prefetch = 0 : i64, scratch_operands = 0 : i64, tpu.core_type = #tpu.core_type<tc>, window_params = [{transform_indices = @transform_0, window_bounds = array<i64: 8, 256>}, {pipeline_mode = #tpu.pipeline_mode<synchronous>, transform_indices = @transform_1, window_bounds = array<i64: 256, 128>}, {pipeline_mode = #tpu.pipeline_mode<synchronous>, transform_indices = @transform_2, window_bounds = array<i64: 1, 128>}, {transform_indices = @transform_3, window_bounds = array<i64: 8, 128>}, {pipeline_mode = #tpu.pipeline_mode<synchronous>, transform_indices = @transform_4, window_bounds = array<i64: 2, 128>}]} {
    %c0_i32 = arith.constant 0 : i32
    %0 = arith.cmpi eq, %arg0, %c0_i32 : i32
    %1 = arith.extui %0 : i1 to i32
    %c0_i32_0 = arith.constant 0 : i32
    %2 = arith.cmpi ne, %1, %c0_i32_0 : i32
    scf.if %2 {
      %cst_17 = arith.constant 0.000000e+00 : f32
      %23 = vector.broadcast %cst_17 : f32 to vector<2x128xf32>
      %c0_18 = arith.constant 0 : index
      %c0_19 = arith.constant 0 : index
      %24 = vector.load %arg5[%c0_18, %c0_19] : memref<2x128xf32, #tpu.memory_space<vmem>>, vector<2x128xf32>
      tpu.vector_store %arg5[%c0_18, %c0_19], %23 {strides = array<i32>} : memref<2x128xf32, #tpu.memory_space<vmem>>, vector<2x128xf32>,
    } else {
    }
    %c0 = arith.constant 0 : index
    %c0_1 = arith.constant 0 : index
    %3 = vector.load %arg1[%c0, %c0_1] : memref<8x256xf32, #tpu.memory_space<vmem>>, vector<8x256xf32>
    %4 = arith.truncf %3 : vector<8x256xf32> to vector<8x256xbf16>
    %c0_2 = arith.constant 0 : index
    %c0_3 = arith.constant 0 : index
    %5 = vector.load %arg2[%c0_2, %c0_3] : memref<256x128xf32, #tpu.memory_space<vmem>>, vector<256x128xf32>
    %6 = arith.truncf %5 : vector<256x128xf32> to vector<256x128xbf16>
    %cst = arith.constant dense<0.000000e+00> : vector<8x128xf32>
    %7 = tpu.matmul %4, %6, %cst {dimension_numbers = #tpu.dot_dimension_numbers<[1], [0], [0], [1], [0, 0, 1, 1], [], []>} : vector<8x256xbf16>, vector<256x128xbf16>, vector<8x128xf32> -> vector<8x128xf32>
    %c0_4 = arith.constant 0 : index
    %c0_5 = arith.constant 0 : index
    %8 = vector.load %arg3[%c0_4, %c0_5] : memref<1x128xf32, #tpu.memory_space<vmem>>, vector<1x128xf32>
    %9 = vector.broadcast %8 : vector<1x128xf32> to vector<8x128xf32>
    %10 = arith.addf %7, %9 : vector<8x128xf32>
    %c0_6 = arith.constant 0 : index
    %c0_7 = arith.constant 0 : index
    %11 = vector.load %arg4[%c0_6, %c0_7] : memref<8x128xf32, #tpu.memory_space<vmem>>, vector<8x128xf32>
    tpu.vector_store %arg4[%c0_6, %c0_7], %10 {strides = array<i32>} : memref<8x128xf32, #tpu.memory_space<vmem>>, vector<8x128xf32>,
    %c0_8 = arith.constant 0 : index
    %c0_9 = arith.constant 0 : index
    %12 = vector.load %arg5[%c0_8, %c0_9] : memref<2x128xf32, #tpu.memory_space<vmem>>, vector<1x128xf32>
    %cst_10 = arith.constant dense<0.000000e+00> : vector<128xf32>
    %13 = vector.multi_reduction <add>, %10, %cst_10 [0] : vector<8x128xf32> to vector<128xf32>
    %14 = vector.shape_cast %13 : vector<128xf32> to vector<1x128xf32>
    %15 = arith.addf %12, %14 : vector<1x128xf32>
    %c0_11 = arith.constant 0 : index
    %c0_12 = arith.constant 0 : index
    %16 = vector.load %arg5[%c0_11, %c0_12] : memref<2x128xf32, #tpu.memory_space<vmem>>, vector<1x128xf32>
    tpu.vector_store %arg5[%c0_11, %c0_12], %15 {strides = array<i32>} : memref<2x128xf32, #tpu.memory_space<vmem>>, vector<1x128xf32>,
    %c1 = arith.constant 1 : index
    %c0_13 = arith.constant 0 : index
    %17 = vector.load %arg5[%c1, %c0_13] : memref<2x128xf32, #tpu.memory_space<vmem>>, vector<1x128xf32>
    %18 = arith.mulf %10, %10 : vector<8x128xf32>
    %cst_14 = arith.constant dense<0.000000e+00> : vector<128xf32>
    %19 = vector.multi_reduction <add>, %18, %cst_14 [0] : vector<8x128xf32> to vector<128xf32>
    %20 = vector.shape_cast %19 : vector<128xf32> to vector<1x128xf32>
    %21 = arith.addf %17, %20 : vector<1x128xf32>
    %c1_15 = arith.constant 1 : index
    %c0_16 = arith.constant 0 : index
    %22 = vector.load %arg5[%c1_15, %c0_16] : memref<2x128xf32, #tpu.memory_space<vmem>>, vector<1x128xf32>
    tpu.vector_store %arg5[%c1_15, %c0_16], %21 {strides = array<i32>} : memref<2x128xf32, #tpu.memory_space<vmem>>, vector<1x128xf32>,
    return
  }
  func.func @transform_0(%arg0: i32) -> (i32, i32) {
    %c0_i32 = arith.constant 0 : i32
    %c0_i32_0 = arith.constant 0 : i32
    return %arg0, %c0_i32 : i32, i32
  }
  func.func @transform_1(%arg0: i32) -> (i32, i32) {
    %c0_i32 = arith.constant 0 : i32
    %c0_i32_0 = arith.constant 0 : i32
    %c0_i32_1 = arith.constant 0 : i32
    return %c0_i32, %c0_i32_0 : i32, i32
  }
  func.func @transform_2(%arg0: i32) -> (i32, i32) {
    %c0_i32 = arith.constant 0 : i32
    %c0_i32_0 = arith.constant 0 : i32
    %c0_i32_1 = arith.constant 0 : i32
    return %c0_i32, %c0_i32_0 : i32, i32
  }
  func.func @transform_3(%arg0: i32) -> (i32, i32) {
    %c0_i32 = arith.constant 0 : i32
    %c0_i32_0 = arith.constant 0 : i32
    return %arg0, %c0_i32 : i32, i32
  }
  func.func @transform_4(%arg0: i32) -> (i32, i32) {
    %c0_i32 = arith.constant 0 : i32
    %c0_i32_0 = arith.constant 0 : i32
    %c0_i32_1 = arith.constant 0 : i32
    return %c0_i32, %c0_i32_0 : i32, i32
  }
}

</mosaic_0001>

<llo_original>
// kernel: tpu_custom_call.1
$region0: #{tpu_custom_call.1}
  #allocation0 [shape = 'u32[]', space=smem, size = 0x4, offset = 0x4, fixed_abs, tag = 'smem constant byte address 0x4 - core index']
  #allocation1 [shape = 'u32[72,128]{1,0:T(1,128)}', space=vmem, size = 0x9000, scoped, tag = 'internal scratch']
  %s0 = inlined_call_operand.hbm [shape: f32[32,256], index: 0, kind: input, shape index: {}]
  %s1 = inlined_call_operand.hbm [shape: f32[256,128], index: 1, kind: input, shape index: {}]
  %s2 = inlined_call_operand.vmem [shape: f32[1,128], index: 2, kind: input, shape index: {}]
  %s3 = inlined_call_operand.hbm [shape: f32[32,128], index: 3, kind: output, shape index: {0}]
  %s4 = inlined_call_operand.hbm [shape: f32[2,128], index: 4, kind: output, shape index: {1}]
  %5 = xla_tuple %s3, %s4
  %s6 = sld [smem:[#allocation0]]
  $region65: #{tpu_custom_call.1} parent=0
    _
  %s8 = ssub.s32 1, %s6
  %s9 = scalar_select 0, %s8, %s6
  $region1: #{tpu_custom_call.1} parent=0
    #allocation2 [shape = 'u8[16384]{0}', space=vmem, size = 0x4000, scoped, tag = 'input window, operand 0']
    #allocation3 [shape = 's32[2]{0}', space=sflag, size = 0x8, scoped, tag = 'scoped memory for tpu_custom_call.1']
    #allocation4 [shape = 's32[2]{0}', space=sflag, size = 0x8, scoped, tag = 'scoped memory for tpu_custom_call.1']
    #allocation5 [shape = 'u8[131072]{0}', space=vmem, size = 0x20000, scoped, tag = 'input window, operand 1, single buffered']
    #allocation6 [shape = 's32[1]{0}', space=sflag, size = 0x4, scoped, tag = 'scoped memory for tpu_custom_call.1']
    #allocation7 [shape = 'u8[8192]{0}', space=vmem, size = 0x2000, scoped, tag = 'output window, operand 0']
    #allocation8 [shape = 'u8[1024]{0}', space=vmem, size = 0x400, scoped, tag = 'output window, operand 1, single buffered']
    #allocation9 [shape = 's32[1]{0}', space=sflag, size = 0x4, scoped, tag = 'scoped memory for tpu_custom_call.1']
    %10 = vsyncpa [#allocation3], 0
    %s11 = scalar_lea.sflag [#allocation3], 1
    %12 = vsyncpa %s11, 0
    %13 = vsyncpa [#allocation6], 0
    %14 = vsyncpa [#allocation4], 0
    %s15 = scalar_lea.sflag [#allocation4], 1
    %16 = vsyncpa %s15, 0
    %17 = vsyncpa [#allocation9], 0
    loop: start=0, step=1, limit=6
    $region2: #{tpu_custom_call.1} parent=1 // loop_pre_header
      _
    $region3: #{tpu_custom_call.1} parent=1 // loop_header
      %s19 = sphi 0, %s23
      %p20 = scmp.ge.s32.totalorder %s19, 6
      %s29 = sphi 0, %s31
      %s32 = sphi 0, %s29
      %s33 = sphi 0, %s32
      %s49 = sphi 0, %s33
      %s53 = sphi 0, %s53
      %s55 = sphi 0, %s53
      %s56 = sphi 0, %s55
      %s70 = sphi 0, %s56
      %s74 = sphi 0, %s74
      %s76 = sphi 0, %s74
      %s77 = sphi 0, %s76
      %s91 = sphi 0, %s77
      %s97 = sphi 0, %s99
      %s100 = sphi 0, %s97
      %s101 = sphi 0, %s100
      %s117 = sphi 0, %s101
      %s121 = sphi 0, %s121
      %s123 = sphi 0, %s121
      %s124 = sphi 0, %s123
      %s138 = sphi 0, %s124
    $region4: #{tpu_custom_call.1} parent=1 // loop_header_branch
      %22 = sbr.rel (%p20) target = $region8
    $region5: #{tpu_custom_call.1} parent=1 // loop_body
      %s24 = ssub.s32 %s19, 1
      %s25 = ssub.s32 %s19, 2
      %s26 = sadd.s32 %s19, 1
      %s27 = ssub.s32 %s19, %s26
      %p28 = scmp.eq.s32.totalorder %s27, 0
      %s30 = sadd.s32 %s29, 1
      %s31 = scalar_select %p28, %s29, %s30
      %p34 = pneg %p28
      %p35 = scmp.eq.s32.totalorder %s19, 3
      %p36 = por %p34, %p35
      %p37 = scmp.ne.s32.totalorder %s29, %s32
      %p38 = scmp.eq.s32.totalorder %s19, 0
      %p39 = por %p37, %p38
      %p40 = scmp.ne.s32.totalorder %s29, %s32
      %p41 = scmp.eq.s32.totalorder %s24, 3
      %p42 = por %p40, %p41
      %p43 = scmp.ne.s32.totalorder %s32, %s33
      %p44 = scmp.eq.s32.totalorder %s24, 0
      %p45 = por %p43, %p44
      %p46 = scmp.ne.s32.totalorder %s32, %s33
      %p47 = scmp.eq.s32.totalorder %s25, 3
      %p48 = por %p46, %p47
      %p50 = scmp.ne.s32.totalorder %s33, %s49
      %p51 = scmp.eq.s32.totalorder %s25, 0
      %p52 = por %p50, %p51
      %s54 = sadd.s32 %s53, 1
      %p57 = scmp.eq.s32.totalorder %s19, 3
      %p58 = scmp.ne.s32.totalorder %s53, %s55
      %p59 = scmp.eq.s32.totalorder %s19, 0
      %p60 = por %p58, %p59
      %p61 = scmp.ne.s32.totalorder %s53, %s55
      %p62 = scmp.eq.s32.totalorder %s24, 3
      %p63 = por %p61, %p62
      %p64 = scmp.ne.s32.totalorder %s55, %s56
      %p65 = scmp.eq.s32.totalorder %s24, 0
      %p66 = por %p64, %p65
      %p67 = scmp.ne.s32.totalorder %s55, %s56
      %p68 = scmp.eq.s32.totalorder %s25, 3
      %p69 = por %p67, %p68
      %p71 = scmp.ne.s32.totalorder %s56, %s70
      %p72 = scmp.eq.s32.totalorder %s25, 0
      %p73 = por %p71, %p72
      %s75 = sadd.s32 %s74, 1
      %p78 = scmp.eq.s32.totalorder %s19, 3
      %p79 = scmp.ne.s32.totalorder %s74, %s76
      %p80 = scmp.eq.s32.totalorder %s19, 0
      %p81 = por %p79, %p80
      %p82 = scmp.ne.s32.totalorder %s74, %s76
      %p83 = scmp.eq.s32.totalorder %s24, 3
      %p84 = por %p82, %p83
      %p85 = scmp.ne.s32.totalorder %s76, %s77
      %p86 = scmp.eq.s32.totalorder %s24, 0
      %p87 = por %p85, %p86
      %p88 = scmp.ne.s32.totalorder %s76, %s77
      %p89 = scmp.eq.s32.totalorder %s25, 3
      %p90 = por %p88, %p89
      %p92 = scmp.ne.s32.totalorder %s77, %s91
      %p93 = scmp.eq.s32.totalorder %s25, 0
      %p94 = por %p92, %p93
      %s95 = ssub.s32 %s19, %s26
      %p96 = scmp.eq.s32.totalorder %s95, 0
      %s98 = sadd.s32 %s97, 1
      %s99 = scalar_select %p96, %s97, %s98
      %p102 = pneg %p96
      %p103 = scmp.eq.s32.totalorder %s19, 3
      %p104 = por %p102, %p103
      %p105 = scmp.ne.s32.totalorder %s97, %s100
      %p106 = scmp.eq.s32.totalorder %s19, 0
      %p107 = por %p105, %p106
      %p108 = scmp.ne.s32.totalorder %s97, %s100
      %p109 = scmp.eq.s32.totalorder %s24, 3
      %p110 = por %p108, %p109
      %p111 = scmp.ne.s32.totalorder %s100, %s101
      %p112 = scmp.eq.s32.totalorder %s24, 0
      %p113 = por %p111, %p112
      %p114 = scmp.ne.s32.totalorder %s100, %s101
      %p115 = scmp.eq.s32.totalorder %s25, 3
      %p116 = por %p114, %p115
      %p118 = scmp.ne.s32.totalorder %s101, %s117
      %p119 = scmp.eq.s32.totalorder %s25, 0
      %p120 = por %p118, %p119
      %s122 = sadd.s32 %s121, 1
      %p125 = scmp.eq.s32.totalorder %s19, 3
      %p126 = scmp.ne.s32.totalorder %s121, %s123
      %p127 = scmp.eq.s32.totalorder %s19, 0
      %p128 = por %p126, %p127
      %p129 = scmp.ne.s32.totalorder %s121, %s123
      %p130 = scmp.eq.s32.totalorder %s24, 3
      %p131 = por %p129, %p130
      %p132 = scmp.ne.s32.totalorder %s123, %s124
      %p133 = scmp.eq.s32.totalorder %s24, 0
      %p134 = por %p132, %p133
      %p135 = scmp.ne.s32.totalorder %s123, %s124
      %p136 = scmp.eq.s32.totalorder %s25, 3
      %p137 = por %p135, %p136
      %p139 = scmp.ne.s32.totalorder %s124, %s138
      %p140 = scmp.eq.s32.totalorder %s25, 0
      %p141 = por %p139, %p140
      %p142 = scmp.le.s32.totalorder 1, %s19
      %p143 = scmp.lt.s32.totalorder %s19, 5
      %p144 = pnand %p142, %p143
      %p145 = pneg %p144
      // Predicated region
      $region9: #{tpu_custom_call.1} parent=5 // pred_check
        _
      $region10: #{tpu_custom_call.1} parent=5 // pred_check_branch
        %147 = sbr.rel (%p144) target = $region12
      $region11: #{tpu_custom_call.1} parent=5 // pred_region
        %s148 = ssub.s32 %s19, 1
        // Predicated region
        $region13: #{tpu_custom_call.1} parent=11 // pred_check
          %p149 = pneg %p66
        $region14: #{tpu_custom_call.1} parent=11 // pred_check_branch
          %151 = sbr.rel (%p149) target = $region16
        $region15: #{tpu_custom_call.1} parent=11 // pred_region
          %153 = vsyncadd [#allocation6], 0
          %s154 = sshll.u32 %s1, 4
          %s155 = int_to_ptr.hbm [resolvable:$true] %s154
          %s156 = sshll.u32 [#allocation5], 4
          %s157 = int_to_ptr.vmem [resolvable:$true] %s156
          %162 = dma.hbm_to_vmem [thread:$0]  %s155, 4096, %s157, [#allocation6], 128, 128, 8
        $region16: #{tpu_custom_call.1} parent=11 // pred_fallthru
          _
        // Predicated region
        $region17: #{tpu_custom_call.1} parent=11 // pred_check
          %p163 = pneg %p87
        $region18: #{tpu_custom_call.1} parent=11 // pred_check_branch
          %165 = sbr.rel (%p163) target = $region20
        $region19: #{tpu_custom_call.1} parent=11 // pred_region
          _
        $region20: #{tpu_custom_call.1} parent=11 // pred_fallthru
          _
      $region12: #{tpu_custom_call.1} parent=5 // pred_fallthru
        _
      %p166 = scmp.lt.s32.totalorder %s19, 4
      // Predicated region
      $region21: #{tpu_custom_call.1} parent=5 // pred_check
        %p167 = pneg %p166
      $region22: #{tpu_custom_call.1} parent=5 // pred_check_branch
        %169 = sbr.rel (%p167) target = $region24
      $region23: #{tpu_custom_call.1} parent=5 // pred_region
        // Predicated region
        $region25: #{tpu_custom_call.1} parent=23 // pred_check
          %p170 = pneg %p39
        $region26: #{tpu_custom_call.1} parent=23 // pred_check_branch
          %172 = sbr.rel (%p170) target = $region28
        $region27: #{tpu_custom_call.1} parent=23 // pred_region
          %s173 = sand.u32 %s29, 1
          %s174 = scalar_lea.sflag [#allocation3], %s173
          %s175 = sand.u32 %s29, 1
          %s176 = smul.addr %s175, 16
          %s177 = scalar_lea.vmem [#allocation2], %s176
          %179 = vsyncadd %s174, 0
          %s180 = smul.addr %s19, 2
          %s181 = smul.addr %s180, 8
          %s182 = scalar_lea.hbm %s0, %s181
          %s184 = sshll.u32 %s182, 4
          %s185 = int_to_ptr.hbm [resolvable:$true] %s184
          %s186 = sshll.u32 %s177, 4
          %s187 = int_to_ptr.vmem [resolvable:$true] %s186
          %189 = dma.hbm_to_vmem [thread:$0]  %s185, 256, %s187, %s174
        $region28: #{tpu_custom_call.1} parent=23 // pred_fallthru
          _
      $region24: #{tpu_custom_call.1} parent=5 // pred_fallthru
        _
      %p190 = scmp.le.s32.totalorder 1, %s19
      %p191 = scmp.lt.s32.totalorder %s19, 5
      %p192 = pnand %p190, %p191
      %p193 = pneg %p192
      // Predicated region
      $region29: #{tpu_custom_call.1} parent=5 // pred_check
        _
      $region30: #{tpu_custom_call.1} parent=5 // pred_check_branch
        %195 = sbr.rel (%p192) target = $region32
      $region31: #{tpu_custom_call.1} parent=5 // pred_region
        %s196 = ssub.s32 %s19, 1
        %s197 = sand.u32 %s32, 1
        %s198 = scalar_lea.sflag [#allocation3], %s197
        %s199 = sand.u32 %s32, 1
        %s200 = smul.addr %s199, 16
        %s201 = scalar_lea.vmem [#allocation2], %s200
        // Predicated region
        $region33: #{tpu_custom_call.1} parent=31 // pred_check
          %p202 = pneg %p45
        $region34: #{tpu_custom_call.1} parent=31 // pred_check_branch
          %204 = sbr.rel (%p202) target = $region36
        $region35: #{tpu_custom_call.1} parent=31 // pred_region
          %206 = dma.done %s198, 256
        $region36: #{tpu_custom_call.1} parent=31 // pred_fallthru
          _
        // Predicated region
        $region37: #{tpu_custom_call.1} parent=31 // pred_check
          %p207 = pneg %p66
        $region38: #{tpu_custom_call.1} parent=31 // pred_check_branch
          %209 = sbr.rel (%p207) target = $region40
        $region39: #{tpu_custom_call.1} parent=31 // pred_region
          %211 = dma.done [#allocation6], 4096
        $region40: #{tpu_custom_call.1} parent=31 // pred_fallthru
          _
        %s212 = sand.u32 %s32, 1
        %s213 = scalar_lea.sflag [#allocation3], %s212
        %s214 = sand.u32 %s32, 1
        %s215 = smul.addr %s214, 16
        %s216 = scalar_lea.vmem [#allocation2], %s215
        %p217 = pneg %p45
        %p218 = pneg %p42
        %p219 = pneg %p66
        %p220 = pneg %p63
        %p221 = pneg %p87
        %p222 = pneg %p84
        %p223 = pneg %p113
        %p224 = pneg %p110
        %s225 = sand.u32 %s100, 1
        %s226 = scalar_lea.sflag [#allocation4], %s225
        %s227 = sand.u32 %s100, 1
        %s228 = smul.addr %s227, 8
        %s229 = scalar_lea.vmem [#allocation7], %s228
        %p230 = pneg %p134
        %p231 = pneg %p131
        %p232 = scmp.eq.s32.totalorder %s24, 0
        // Predicated region
        $region41: #{tpu_custom_call.1} parent=31 // pred_check
          %p233 = pneg %p232
        $region42: #{tpu_custom_call.1} parent=31 // pred_check_branch
          %235 = sbr.rel (%p233) target = $region44
        $region43: #{tpu_custom_call.1} parent=31 // pred_region
          %236 = vst [vmem:[#allocation8] sm:$0x3] 0.0
        $region44: #{tpu_custom_call.1} parent=31 // pred_fallthru
          _
        %v237 = vld [vmem:[%s201] sm:$0xff]
        %v238 = vld [vmem:[%s201 + $0x8] sm:$0xff]
        %v239 = vpack.c.bf16 %v237, %v237
        %v240 = vpack.c.bf16 %v238, %v238
        %v241 = vld [vmem:[#allocation5] sm:$0xff]
        %v242 = vld [vmem:[#allocation5 + $0x8] sm:$0xff]
        %v243 = vld [vmem:[#allocation5 + $0x10] sm:$0xff]
        %v244 = vld [vmem:[#allocation5 + $0x18] sm:$0xff]
        %v245 = vld [vmem:[#allocation5 + $0x20] sm:$0xff]
        %v246 = vld [vmem:[#allocation5 + $0x28] sm:$0xff]
        %v247 = vld [vmem:[#allocation5 + $0x30] sm:$0xff]
        %v248 = vld [vmem:[#allocation5 + $0x38] sm:$0xff]
        %v249 = vld [vmem:[#allocation5 + $0x40] sm:$0xff]
        %v250 = vld [vmem:[#allocation5 + $0x48] sm:$0xff]
        %v251 = vld [vmem:[#allocation5 + $0x50] sm:$0xff]
        %v252 = vld [vmem:[#allocation5 + $0x58] sm:$0xff]
        %v253 = vld [vmem:[#allocation5 + $0x60] sm:$0xff]
        %v254 = vld [vmem:[#allocation5 + $0x68] sm:$0xff]
        %v255 = vld [vmem:[#allocation5 + $0x70] sm:$0xff]
        %v256 = vld [vmem:[#allocation5 + $0x78] sm:$0xff]
        %v257 = vld [vmem:[#allocation5 + $0x80] sm:$0xff]
        %v258 = vld [vmem:[#allocation5 + $0x88] sm:$0xff]
        %v259 = vld [vmem:[#allocation5 + $0x90] sm:$0xff]
        %v260 = vld [vmem:[#allocation5 + $0x98] sm:$0xff]
        %v261 = vld [vmem:[#allocation5 + $0xa0] sm:$0xff]
        %v262 = vld [vmem:[#allocation5 + $0xa8] sm:$0xff]
        %v263 = vld [vmem:[#allocation5 + $0xb0] sm:$0xff]
        %v264 = vld [vmem:[#allocation5 + $0xb8] sm:$0xff]
        %v265 = vld [vmem:[#allocation5 + $0xc0] sm:$0xff]
        %v266 = vld [vmem:[#allocation5 + $0xc8] sm:$0xff]
        %v267 = vld [vmem:[#allocation5 + $0xd0] sm:$0xff]
        %v268 = vld [vmem:[#allocation5 + $0xd8] sm:$0xff]
        %v269 = vld [vmem:[#allocation5 + $0xe0] sm:$0xff]
        %v270 = vld [vmem:[#allocation5 + $0xe8] sm:$0xff]
        %v271 = vld [vmem:[#allocation5 + $0xf0] sm:$0xff]
        %v272 = vld [vmem:[#allocation5 + $0xf8] sm:$0xff]
        %v273 = vpack.c.bf16 %v242, %v241
        %v274 = vpack.c.bf16 %v244, %v243
        %v275 = vpack.c.bf16 %v246, %v245
        %v276 = vpack.c.bf16 %v248, %v247
        %v277 = vpack.c.bf16 %v250, %v249
        %v278 = vpack.c.bf16 %v252, %v251
        %v279 = vpack.c.bf16 %v254, %v253
        %v280 = vpack.c.bf16 %v256, %v255
        %v281 = vpack.c.bf16 %v258, %v257
        %v282 = vpack.c.bf16 %v260, %v259
        %v283 = vpack.c.bf16 %v262, %v261
        %v284 = vpack.c.bf16 %v264, %v263
        %v285 = vpack.c.bf16 %v266, %v265
        %v286 = vpack.c.bf16 %v268, %v267
        %v287 = vpack.c.bf16 %v270, %v269
        %v288 = vpack.c.bf16 %v272, %v271
        %v289 = vld [vmem:[%s2] sm:$0x1]
        %v291 = vperm.slane %v289, 0
        %293 = vmatpush.bf16.msra.mxu0 %v280
        %294 = vmatpush.bf16.msra.mxu0 %v279
        %295 = vmatpush.bf16.msra.mxu0 %v278
        %296 = vmatpush.bf16.msra.mxu0 %v277
        %297 = vmatpush.bf16.msra.mxu0 %v276
        %298 = vmatpush.bf16.msra.mxu0 %v275
        %299 = vmatpush.bf16.msra.mxu0 %v274
        %300 = vmatpush.bf16.msra.mxu0 %v273
        %301 = vmatmul.bf16.gmra.mxu0 %v239
        %v302 = vpop.f32.mrf.mxu0
        %v303 = vadd.f32 %v291, %v302
        %v304 = vpop.f32.mrf.mxu0
        %305 = vdwg.mxu0
        %306 = vmatpush.bf16.msra.mxu0 %v288
        %307 = vmatpush.bf16.msra.mxu0 %v287
        %308 = vmatpush.bf16.msra.mxu0 %v286
        %309 = vmatpush.bf16.msra.mxu0 %v285
        %310 = vmatpush.bf16.msra.mxu0 %v284
        %311 = vmatpush.bf16.msra.mxu0 %v283
        %312 = vmatpush.bf16.msra.mxu0 %v282
        %313 = vmatpush.bf16.msra.mxu0 %v281
        %314 = vmatmul.bf16.gmra.mxu0 %v240
        %v315 = vpop.f32.mrf.mxu0
        %v316 = vadd.f32 %v303, %v315
        %v317 = vpop.f32.mrf.mxu0
        %318 = vdwg.mxu0
        %319 = vst [vmem:[%s229] sm:$0xff] %v316
        %v320 = vld [vmem:[#allocation8] sm:$0x1]
        %v321 = vrot.slane %v316, 4
        %v322 = vadd.f32 %v316, %v321
        %v323 = vrot.slane %v322, 2
        %v324 = vadd.f32 %v322, %v323
        %v325 = vrot.slane %v324, 1
        %v326 = vadd.f32 %v324, %v325
        %v327 = vadd.f32 %v320, %v326
        %328 = vst [vmem:[#allocation8] sm:$0x1] %v327
        %v329 = vld [vmem:[#allocation8 + $0x1] sm:$0x1]
        %v330 = vmul.f32 %v316, %v316
        %v331 = vrot.slane %v330, 4
        %v332 = vadd.f32 %v330, %v331
        %v333 = vrot.slane %v332, 2
        %v334 = vadd.f32 %v332, %v333
        %v335 = vrot.slane %v334, 1
        %v336 = vadd.f32 %v334, %v335
        %v337 = vadd.f32 %v329, %v336
        %338 = vst [vmem:[#allocation8 + $0x1] sm:$0x1] %v337
        %s339 = sand.u32 %s100, 1
        %s340 = scalar_lea.sflag [#allocation4], %s339
        %s341 = sand.u32 %s100, 1
        %s342 = smul.addr %s341, 8
        %s343 = scalar_lea.vmem [#allocation7], %s342
        // Predicated region
        $region45: #{tpu_custom_call.1} parent=31 // pred_check
          %p344 = pneg %p110
        $region46: #{tpu_custom_call.1} parent=31 // pred_check_branch
          %346 = sbr.rel (%p344) target = $region48
        $region47: #{tpu_custom_call.1} parent=31 // pred_region
          %348 = vsyncadd %s340, 0
          %s349 = smul.addr %s24, 8
          %s350 = scalar_lea.hbm %s3, %s349
          %s352 = sshll.u32 %s343, 4
          %s353 = int_to_ptr.vmem [resolvable:$true] %s352
          %s354 = sshll.u32 %s350, 4
          %s355 = int_to_ptr.hbm [resolvable:$true] %s354
          %357 = dma.vmem_to_hbm [thread:$0]  %s353, 128, %s355, %s340
        $region48: #{tpu_custom_call.1} parent=31 // pred_fallthru
          _
        // Predicated region
        $region49: #{tpu_custom_call.1} parent=31 // pred_check
          %p358 = pneg %p131
        $region50: #{tpu_custom_call.1} parent=31 // pred_check_branch
          %360 = sbr.rel (%p358) target = $region52
        $region51: #{tpu_custom_call.1} parent=31 // pred_region
          %362 = vsyncadd [#allocation9], 0
          %s364 = sshll.u32 [#allocation8], 4
          %s365 = int_to_ptr.vmem [resolvable:$true] %s364
          %s366 = sshll.u32 %s4, 4
          %s367 = int_to_ptr.hbm [resolvable:$true] %s366
          %369 = dma.vmem_to_hbm [thread:$0]  %s365, 32, %s367, [#allocation9]
        $region52: #{tpu_custom_call.1} parent=31 // pred_fallthru
          _
        // Predicated region
        $region53: #{tpu_custom_call.1} parent=31 // pred_check
          %p370 = pneg %p131
        $region54: #{tpu_custom_call.1} parent=31 // pred_check_branch
          %372 = sbr.rel (%p370) target = $region56
        $region55: #{tpu_custom_call.1} parent=31 // pred_region
          %374 = dma.done [#allocation9], 32
        $region56: #{tpu_custom_call.1} parent=31 // pred_fallthru
          _
      $region32: #{tpu_custom_call.1} parent=5 // pred_fallthru
        _
      %p375 = scmp.le.s32.totalorder 2, %s19
      // Predicated region
      $region57: #{tpu_custom_call.1} parent=5 // pred_check
        %p376 = pneg %p375
      $region58: #{tpu_custom_call.1} parent=5 // pred_check_branch
        %378 = sbr.rel (%p376) target = $region60
      $region59: #{tpu_custom_call.1} parent=5 // pred_region
        %s379 = ssub.s32 %s19, 2
        // Predicated region
        $region61: #{tpu_custom_call.1} parent=59 // pred_check
          %p380 = pneg %p116
        $region62: #{tpu_custom_call.1} parent=59 // pred_check_branch
          %382 = sbr.rel (%p380) target = $region64
        $region63: #{tpu_custom_call.1} parent=59 // pred_region
          %s383 = sand.u32 %s101, 1
          %s384 = scalar_lea.sflag [#allocation4], %s383
          %s385 = sand.u32 %s101, 1
          %s386 = smul.addr %s385, 8
          %s387 = scalar_lea.vmem [#allocation7], %s386
          %389 = dma.done %s384, 128
        $region64: #{tpu_custom_call.1} parent=59 // pred_fallthru
          _
      $region60: #{tpu_custom_call.1} parent=5 // pred_fallthru
        _
    $region6: #{tpu_custom_call.1} parent=1 // loop_footer
      %s23 = sadd.s32 1, %s19
    $region7: #{tpu_custom_call.1} parent=1 // loop_footer_branch
      %18 = sbr.rel target = $region3
    $region8: #{tpu_custom_call.1} parent=1 // loop_exit
      _
    %390 = vsyncpa [#allocation3], 1
    %s391 = scalar_lea.sflag [#allocation3], 1
    %392 = vsyncpa %s391, 1
    %393 = vsyncpa [#allocation6], 1
    %394 = vsyncpa [#allocation4], 1
    %s395 = scalar_lea.sflag [#allocation4], 1
    %396 = vsyncpa %s395, 1
    %397 = vsyncpa [#allocation9], 1

</llo_original>
